<compile_context>
chip_gen: v6e
topology: v6e:2x2x1
jax: 0.10.0
libtpu: 0.0.40
codegen_flags: <defaults>
</compile_context>

<pallas_src>
import jax
import jax.numpy as jnp
from jax import lax
from jax.experimental import pallas as pl
from jax.experimental.pallas import tpu as pltpu

B = 2          # batch
IN_F = 5       # in_features   (weight is (out, in) = (5, 5) like torch.randn(5, 5))
OUT_F = 5      # out_features


# ---------------------------------------------------------------------------
# Kernel body: whole problem in one shot, all operands already in VMEM.
# ---------------------------------------------------------------------------
def linear_kernel(x_ref, wt_ref, b_ref, o_ref):
    # One MXU matmul (f32 accumulation, full precision), bias add on the VPU.
    y = jnp.dot(
        x_ref[...], wt_ref[...],
        preferred_element_type=jnp.float32,
        precision=lax.Precision.HIGHEST,
    )
    o_ref[...] = y + b_ref[...]


# ---------------------------------------------------------------------------
# Wrapper
# ---------------------------------------------------------------------------
def linear(x, weight, bias):
    """F.linear semantics: y = x @ weight.T + bias.  x: (B, in), weight: (out, in)."""
    batch, in_f = x.shape
    out_f = weight.shape[0]
    assert in_f == weight.shape[1]

    wt = jnp.transpose(weight)        # (in, out): avoid an in-kernel XLU transpose
    b2 = bias.reshape(1, out_f)       # 2-D for clean VMEM layout / row broadcast

    vmem = lambda: pl.BlockSpec(memory_space=pltpu.MemorySpace.VMEM)
    return pl.pallas_call(
        linear_kernel,
        out_shape=jax.ShapeDtypeStruct((batch, out_f), jnp.float32),
        in_specs=[vmem(), vmem(), vmem()],   # whole arrays resident in VMEM
        out_specs=vmem(),
    )(x, wt, b2)


# ---------------------------------------------------------------------------
if __name__ == "__main__":
    key = jax.random.PRNGKey(0)
    kx, kw, kb = jax.random.split(key, 3)

    # Deterministic example inputs at the shapes the module implies.
    x = jax.random.normal(kx, (B, IN_F), jnp.float32)
    weight = jax.random.normal(kw, (OUT_F, IN_F), jnp.float32)   # torch.randn(5, 5)
    bias = jax.random.normal(kb, (OUT_F,), jnp.float32)          # torch.randn(5)

    out = jax.block_until_ready(linear(x, weight, bias))

    # Pure-JAX reference check.
    ref = x @ weight.T + bias
    max_err = float(jnp.max(jnp.abs(out - ref)))
    assert out.shape == (B, OUT_F), out.shape
    assert max_err < 1e-3, f"max abs error vs reference: {max_err}"

    print("KERNEL_OK")
</pallas_src>

<mosaic_0001>
module attributes {stable_mosaic.version = 11 : i64} {
  func.func @linear_kernel(%arg0: memref<2x5xf32, #tpu.memory_space<vmem>>, %arg1: memref<5x5xf32, #tpu.memory_space<vmem>>, %arg2: memref<1x5xf32, #tpu.memory_space<vmem>>, %arg3: memref<2x5xf32, #tpu.memory_space<vmem>>) attributes {dimension_semantics = [], scalar_prefetch = 0 : i64, scratch_operands = 0 : i64, tpu.core_type = #tpu.core_type<tc>} {
    %c0 = arith.constant 0 : index
    %c0_0 = arith.constant 0 : index
    %0 = vector.load %arg0[%c0, %c0_0] : memref<2x5xf32, #tpu.memory_space<vmem>>, vector<2x5xf32>
    %c0_1 = arith.constant 0 : index
    %c0_2 = arith.constant 0 : index
    %1 = vector.load %arg1[%c0_1, %c0_2] : memref<5x5xf32, #tpu.memory_space<vmem>>, vector<5x5xf32>
    %cst = arith.constant dense<0.000000e+00> : vector<2x5xf32>
    %2 = tpu.matmul %0, %1, %cst {dimension_numbers = #tpu.dot_dimension_numbers<[1], [0], [0], [1], [0, 0, 1, 1], [], []>, precision = #tpu.contract_precision<fp32>} : vector<2x5xf32>, vector<5x5xf32>, vector<2x5xf32> -> vector<2x5xf32>
    %c0_3 = arith.constant 0 : index
    %c0_4 = arith.constant 0 : index
    %3 = vector.load %arg2[%c0_3, %c0_4] : memref<1x5xf32, #tpu.memory_space<vmem>>, vector<1x5xf32>
    %4 = vector.broadcast %3 : vector<1x5xf32> to vector<2x5xf32>
    %5 = arith.addf %2, %4 : vector<2x5xf32>
    %c0_5 = arith.constant 0 : index
    %c0_6 = arith.constant 0 : index
    %6 = vector.load %arg3[%c0_5, %c0_6] : memref<2x5xf32, #tpu.memory_space<vmem>>, vector<2x5xf32>
    tpu.vector_store %arg3[%c0_5, %c0_6], %5 {strides = array<i32>} : memref<2x5xf32, #tpu.memory_space<vmem>>, vector<2x5xf32>,
    return
  }
}

</mosaic_0001>

<llo_original>
// kernel: tpu_custom_call.1
$region0: #{tpu_custom_call.1}
  #allocation0 [shape = 'u32[]', space=smem, size = 0x4, offset = 0x4, fixed_abs, tag = 'smem constant byte address 0x4 - core index']
  #allocation1 [shape = 'u32[144,128]{1,0:T(1,128)}', space=vmem, size = 0x12000, scoped, tag = 'internal scratch']
  %s0 = inlined_call_operand.hbm [shape: f32[2,5], index: 0, kind: input, shape index: {}]
  %s1 = inlined_call_operand.hbm [shape: f32[5,5], index: 1, kind: input, shape index: {}]
  %s2 = inlined_call_operand.vmem [shape: f32[1,5], index: 2, kind: input, shape index: {}]
  %s3 = inlined_call_operand.hbm [shape: f32[2,5], index: 3, kind: output, shape index: {}]
  %s4 = sld [smem:[#allocation0]]
  $region30: #{tpu_custom_call.1} parent=0
    _
  %s6 = ssub.s32 1, %s4
  %s7 = scalar_select 0, %s6, %s4
  $region1: #{tpu_custom_call.1} parent=0
    #allocation2 [shape = 'u8[1024]{0}', space=vmem, size = 0x400, scoped, tag = 'input window, operand 0, single buffered']
    #allocation3 [shape = 's32[1]{0}', space=sflag, size = 0x4, scoped, tag = 'scoped memory for tpu_custom_call.1']
    #allocation4 [shape = 's32[1]{0}', space=sflag, size = 0x4, scoped, tag = 'scoped memory for tpu_custom_call.1']
    #allocation5 [shape = 'u8[4096]{0}', space=vmem, size = 0x1000, scoped, tag = 'input window, operand 1, single buffered']
    #allocation6 [shape = 's32[1]{0}', space=sflag, size = 0x4, scoped, tag = 'scoped memory for tpu_custom_call.1']
    #allocation7 [shape = 'u8[1024]{0}', space=vmem, size = 0x400, scoped, tag = 'output window, operand 0, single buffered']
    %8 = vsyncpa [#allocation3], 0
    %9 = vsyncpa [#allocation6], 0
    %10 = vsyncpa [#allocation4], 0
    // Predicated region
    $region2: #{tpu_custom_call.1} parent=1 // pred_check
      _
    $region3: #{tpu_custom_call.1} parent=1 // pred_check_branch
      %12 = sbr.rel (0) target = $region5
    $region4: #{tpu_custom_call.1} parent=1 // pred_region
      %s14 = ssub.s32 32, 32
      %15 = vsyncadd [#allocation3], %s14
      %s17 = sshll.u32 [#allocation2], 4
      %s18 = int_to_ptr.vmem [resolvable:$true] %s17
      %20 = dma.hbm_to_vmem [thread:$0]  %s0, 32, %s18, [#allocation3]
    $region5: #{tpu_custom_call.1} parent=1 // pred_fallthru
      _
    // Predicated region
    $region6: #{tpu_custom_call.1} parent=1 // pred_check
      _
    $region7: #{tpu_custom_call.1} parent=1 // pred_check_branch
      %22 = sbr.rel (0) target = $region9
    $region8: #{tpu_custom_call.1} parent=1 // pred_region
      %s24 = ssub.s32 128, 128
      %25 = vsyncadd [#allocation6], %s24
      %s27 = sshll.u32 [#allocation5], 4
      %s28 = int_to_ptr.vmem [resolvable:$true] %s27
      %30 = dma.hbm_to_vmem [thread:$0]  %s1, 128, %s28, [#allocation6]
    $region9: #{tpu_custom_call.1} parent=1 // pred_fallthru
      _
    // Predicated region
    $region10: #{tpu_custom_call.1} parent=1 // pred_check
      _
    $region11: #{tpu_custom_call.1} parent=1 // pred_check_branch
      %32 = sbr.rel (0) target = $region13
    $region12: #{tpu_custom_call.1} parent=1 // pred_region
      _
    $region13: #{tpu_custom_call.1} parent=1 // pred_fallthru
      _
    // Predicated region
    $region14: #{tpu_custom_call.1} parent=1 // pred_check
      _
    $region15: #{tpu_custom_call.1} parent=1 // pred_check_branch
      %34 = sbr.rel (0) target = $region17
    $region16: #{tpu_custom_call.1} parent=1 // pred_region
      %35 = dma.done [#allocation3], 32
    $region17: #{tpu_custom_call.1} parent=1 // pred_fallthru
      _
    // Predicated region
    $region18: #{tpu_custom_call.1} parent=1 // pred_check
      _
    $region19: #{tpu_custom_call.1} parent=1 // pred_check_branch
      %37 = sbr.rel (0) target = $region21
    $region20: #{tpu_custom_call.1} parent=1 // pred_region
      %38 = dma.done [#allocation6], 128
    $region21: #{tpu_custom_call.1} parent=1 // pred_fallthru
      _
    %v39 = vld [vmem:[#allocation2] sm:$0x3]
    %v40 = vld [vmem:[#allocation5] sm:$0x1f]
    %v41 = vld [vmem:[%s2] sm:$0x1]
    %v43 = vlaneseq
    %v44 = vshrl.u32 %v43, 7
    %v45 = vsub.s32 0, %v44
    %v46 = vrot.slane %v41, %v45
    %vm48 = vcmask 39936
    %v50 = vsel %vm48, %v39, 0
    %vm52 = vcmask 1044480
    %v54 = vsel %vm52, %v40, 0
    %56 = vmatprep.subr.mxu0 0.0
    %57 = vmatpush1.msra.mxu0 0.0
    %58 = vmatprep.subr.mxu0 0.0
    %59 = vmatpush1.msra.mxu0 0.0
    %60 = vmatprep.subr.mxu0 0.0
    %61 = vmatpush1.msra.mxu0 0.0
    %62 = vmatprep.subr.mxu0 0.0
    %63 = vmatpush1.msra.mxu0 0.0
    %64 = vmatprep.subr.mxu0 0.0
    %65 = vmatpush1.msra.mxu0 0.0
    %66 = vmatprep.subr.mxu0 0.0
    %67 = vmatpush1.msra.mxu0 0.0
    %68 = vmatprep.subr.mxu0 0.0
    %69 = vmatpush1.msra.mxu0 0.0
    %70 = vmatprep.subr.mxu0 0.0
    %71 = vmatpush1.msra.mxu0 0.0
    %72 = vmatprep.subr.mxu0 0.0
    %73 = vmatpush1.msra.mxu0 0.0
    %74 = vmatprep.subr.mxu0 0.0
    %75 = vmatpush1.msra.mxu0 0.0
    %76 = vmatprep.subr.mxu0 0.0
    %77 = vmatpush1.msra.mxu0 0.0
    %78 = vmatprep.subr.mxu0 0.0
    %79 = vmatpush1.msra.mxu0 0.0
    %80 = vmatprep.subr.mxu0 0.0
    %81 = vmatpush1.msra.mxu0 0.0
    %82 = vmatprep.subr.mxu0 0.0
    %83 = vmatpush1.msra.mxu0 0.0
    %84 = vmatprep.subr.mxu0 0.0
    %85 = vmatpush1.msra.mxu0 0.0
    %86 = vmatprep.subr.mxu0 0.0
    %v87 = vand.u32 %v54, 4294901760
    %88 = vmatpush1.msra.mxu0 %v87
    %89 = vmatprep.subr.mxu0 0.0
    %90 = vmatpush2.msra.mxu0 0.0
    %91 = vmatprep.subr.mxu0 0.0
    %92 = vmatpush2.msra.mxu0 0.0
    %93 = vmatprep.subr.mxu0 0.0
    %94 = vmatpush2.msra.mxu0 0.0
    %95 = vmatprep.subr.mxu0 0.0
    %96 = vmatpush2.msra.mxu0 0.0
    %97 = vmatprep.subr.mxu0 0.0
    %98 = vmatpush2.msra.mxu0 0.0
    %99 = vmatprep.subr.mxu0 0.0
    %100 = vmatpush2.msra.mxu0 0.0
    %101 = vmatprep.subr.mxu0 0.0
    %102 = vmatpush2.msra.mxu0 0.0
    %103 = vmatprep.subr.mxu0 0.0
    %104 = vmatpush2.msra.mxu0 0.0
    %105 = vmatprep.subr.mxu0 0.0
    %106 = vmatpush2.msra.mxu0 0.0
    %107 = vmatprep.subr.mxu0 0.0
    %108 = vmatpush2.msra.mxu0 0.0
    %109 = vmatprep.subr.mxu0 0.0
    %110 = vmatpush2.msra.mxu0 0.0
    %111 = vmatprep.subr.mxu0 0.0
    %112 = vmatpush2.msra.mxu0 0.0
    %113 = vmatprep.subr.mxu0 0.0
    %114 = vmatpush2.msra.mxu0 0.0
    %115 = vmatprep.subr.mxu0 0.0
    %116 = vmatpush2.msra.mxu0 0.0
    %117 = vmatprep.subr.mxu0 0.0
    %118 = vmatpush2.msra.mxu0 0.0
    %119 = vmatprep.subr.mxu0 0.0
    %120 = vmatpush2.msra.mxu0 0.0
    %121 = vmatprep.mubr.f32.mxu0 0.0
    %v122 = vand.u32 %v50, 4294901760
    %v123 = vsub.f32 %v50, %v122
    %v124 = vand.u32 %v123, 4294901760
    %v125 = vsub.f32 %v123, %v124
    %v126 = vand.u32 %v125, 4294901760
    %127 = vmatmul.mubr.f32.gmra.mxu0 %v126
    %v128 = vpop.f32.mrf.mxu0
    %v129 = vadd.f32 %v46, %v128
    %v130 = vpop.f32.mrf.mxu0
    %131 = vdwg.mxu0
    %132 = vmatprep.subr.mxu0 0.0
    %133 = vmatpush1.msra.mxu0 0.0
    %134 = vmatprep.subr.mxu0 0.0
    %135 = vmatpush1.msra.mxu0 0.0
    %136 = vmatprep.subr.mxu0 0.0
    %137 = vmatpush1.msra.mxu0 0.0
    %138 = vmatprep.subr.mxu0 0.0
    %139 = vmatpush1.msra.mxu0 0.0
    %140 = vmatprep.subr.mxu0 0.0
    %141 = vmatpush1.msra.mxu0 0.0
    %142 = vmatprep.subr.mxu0 0.0
    %143 = vmatpush1.msra.mxu0 0.0
    %144 = vmatprep.subr.mxu0 0.0
    %145 = vmatpush1.msra.mxu0 0.0
    %146 = vmatprep.subr.mxu0 0.0
    %147 = vmatpush1.msra.mxu0 0.0
    %148 = vmatprep.subr.mxu0 0.0
    %149 = vmatpush1.msra.mxu0 0.0
    %150 = vmatprep.subr.mxu0 0.0
    %151 = vmatpush1.msra.mxu0 0.0
    %152 = vmatprep.subr.mxu0 0.0
    %153 = vmatpush1.msra.mxu0 0.0
    %154 = vmatprep.subr.mxu0 0.0
    %155 = vmatpush1.msra.mxu0 0.0
    %156 = vmatprep.subr.mxu0 0.0
    %157 = vmatpush1.msra.mxu0 0.0
    %158 = vmatprep.subr.mxu0 0.0
    %159 = vmatpush1.msra.mxu0 0.0
    %160 = vmatprep.subr.mxu0 0.0
    %161 = vmatpush1.msra.mxu0 0.0
    %162 = vmatprep.subr.mxu0 0.0
    %v163 = vand.u32 %v54, 4294901760
    %v164 = vsub.f32 %v54, %v163
    %v165 = vand.u32 %v164, 4294901760
    %v166 = vsub.f32 %v164, %v165
    %v167 = vand.u32 %v166, 4294901760
    %168 = vmatpush1.msra.mxu0 %v167
    %169 = vmatprep.subr.mxu0 0.0
    %170 = vmatpush2.msra.mxu0 0.0
    %171 = vmatprep.subr.mxu0 0.0
    %172 = vmatpush2.msra.mxu0 0.0
    %173 = vmatprep.subr.mxu0 0.0
    %174 = vmatpush2.msra.mxu0 0.0
    %175 = vmatprep.subr.mxu0 0.0
    %176 = vmatpush2.msra.mxu0 0.0
    %177 = vmatprep.subr.mxu0 0.0
    %178 = vmatpush2.msra.mxu0 0.0
    %179 = vmatprep.subr.mxu0 0.0
    %180 = vmatpush2.msra.mxu0 0.0
    %181 = vmatprep.subr.mxu0 0.0
    %182 = vmatpush2.msra.mxu0 0.0
    %183 = vmatprep.subr.mxu0 0.0
    %184 = vmatpush2.msra.mxu0 0.0
    %185 = vmatprep.subr.mxu0 0.0
    %186 = vmatpush2.msra.mxu0 0.0
    %187 = vmatprep.subr.mxu0 0.0
    %188 = vmatpush2.msra.mxu0 0.0
    %189 = vmatprep.subr.mxu0 0.0
    %190 = vmatpush2.msra.mxu0 0.0
    %191 = vmatprep.subr.mxu0 0.0
    %192 = vmatpush2.msra.mxu0 0.0
    %193 = vmatprep.subr.mxu0 0.0
    %194 = vmatpush2.msra.mxu0 0.0
    %195 = vmatprep.subr.mxu0 0.0
    %196 = vmatpush2.msra.mxu0 0.0
    %197 = vmatprep.subr.mxu0 0.0
    %198 = vmatpush2.msra.mxu0 0.0
    %199 = vmatprep.subr.mxu0 0.0
    %200 = vmatpush2.msra.mxu0 0.0
    %201 = vmatprep.mubr.f32.mxu0 0.0
    %v202 = vand.u32 %v50, 4294901760
    %203 = vmatmul.mubr.f32.gmra.mxu0 %v202
    %v204 = vpop.f32.mrf.mxu0
    %v205 = vadd.f32 %v129, %v204
    %v206 = vpop.f32.mrf.mxu0
    %207 = vdwg.mxu0
    %208 = vmatprep.subr.mxu0 0.0
    %209 = vmatpush1.msra.mxu0 0.0
    %210 = vmatprep.subr.mxu0 0.0
    %211 = vmatpush1.msra.mxu0 0.0
    %212 = vmatprep.subr.mxu0 0.0
    %213 = vmatpush1.msra.mxu0 0.0
    %214 = vmatprep.subr.mxu0 0.0
    %215 = vmatpush1.msra.mxu0 0.0
    %216 = vmatprep.subr.mxu0 0.0
    %217 = vmatpush1.msra.mxu0 0.0
    %218 = vmatprep.subr.mxu0 0.0
    %219 = vmatpush1.msra.mxu0 0.0
    %220 = vmatprep.subr.mxu0 0.0
    %221 = vmatpush1.msra.mxu0 0.0
    %222 = vmatprep.subr.mxu0 0.0
    %223 = vmatpush1.msra.mxu0 0.0
    %224 = vmatprep.subr.mxu0 0.0
    %225 = vmatpush1.msra.mxu0 0.0
    %226 = vmatprep.subr.mxu0 0.0
    %227 = vmatpush1.msra.mxu0 0.0
    %228 = vmatprep.subr.mxu0 0.0
    %229 = vmatpush1.msra.mxu0 0.0
    %230 = vmatprep.subr.mxu0 0.0
    %231 = vmatpush1.msra.mxu0 0.0
    %232 = vmatprep.subr.mxu0 0.0
    %233 = vmatpush1.msra.mxu0 0.0
    %234 = vmatprep.subr.mxu0 0.0
    %235 = vmatpush1.msra.mxu0 0.0
    %236 = vmatprep.subr.mxu0 0.0
    %237 = vmatpush1.msra.mxu0 0.0
    %238 = vmatprep.subr.mxu0 0.0
    %v239 = vand.u32 %v54, 4294901760
    %v240 = vsub.f32 %v54, %v239
    %241 = vmatpush1.msra.mxu0 %v240
    %242 = vmatprep.subr.mxu0 0.0
    %243 = vmatpush2.msra.mxu0 0.0
    %244 = vmatprep.subr.mxu0 0.0
    %245 = vmatpush2.msra.mxu0 0.0
    %246 = vmatprep.subr.mxu0 0.0
    %247 = vmatpush2.msra.mxu0 0.0
    %248 = vmatprep.subr.mxu0 0.0
    %249 = vmatpush2.msra.mxu0 0.0
    %250 = vmatprep.subr.mxu0 0.0
    %251 = vmatpush2.msra.mxu0 0.0
    %252 = vmatprep.subr.mxu0 0.0
    %253 = vmatpush2.msra.mxu0 0.0
    %254 = vmatprep.subr.mxu0 0.0
    %255 = vmatpush2.msra.mxu0 0.0
    %256 = vmatprep.subr.mxu0 0.0
    %257 = vmatpush2.msra.mxu0 0.0
    %258 = vmatprep.subr.mxu0 0.0
    %259 = vmatpush2.msra.mxu0 0.0
    %260 = vmatprep.subr.mxu0 0.0
    %261 = vmatpush2.msra.mxu0 0.0
    %262 = vmatprep.subr.mxu0 0.0
    %263 = vmatpush2.msra.mxu0 0.0
    %264 = vmatprep.subr.mxu0 0.0
    %265 = vmatpush2.msra.mxu0 0.0
    %266 = vmatprep.subr.mxu0 0.0
    %267 = vmatpush2.msra.mxu0 0.0
    %268 = vmatprep.subr.mxu0 0.0
    %269 = vmatpush2.msra.mxu0 0.0
    %270 = vmatprep.subr.mxu0 0.0
    %271 = vmatpush2.msra.mxu0 0.0
    %272 = vmatprep.subr.mxu0 0.0
    %273 = vmatpush2.msra.mxu0 0.0
    %274 = vmatprep.mubr.f32.mxu0 0.0
    %v275 = vand.u32 %v50, 4294901760
    %v276 = vsub.f32 %v50, %v275
    %277 = vmatmul.mubr.f32.gmra.mxu0 %v276
    %v278 = vpop.f32.mrf.mxu0
    %v279 = vadd.f32 %v205, %v278
    %v280 = vpop.f32.mrf.mxu0
    %281 = vdwg.mxu0
    %282 = vmatprep.subr.mxu0 0.0
    %283 = vmatpush1.msra.mxu0 0.0
    %284 = vmatprep.subr.mxu0 0.0
    %285 = vmatpush1.msra.mxu0 0.0
    %286 = vmatprep.subr.mxu0 0.0
    %287 = vmatpush1.msra.mxu0 0.0
    %288 = vmatprep.subr.mxu0 0.0
    %289 = vmatpush1.msra.mxu0 0.0
    %290 = vmatprep.subr.mxu0 0.0
    %291 = vmatpush1.msra.mxu0 0.0
    %292 = vmatprep.subr.mxu0 0.0
    %293 = vmatpush1.msra.mxu0 0.0
    %294 = vmatprep.subr.mxu0 0.0
    %295 = vmatpush1.msra.mxu0 0.0
    %296 = vmatprep.subr.mxu0 0.0
    %297 = vmatpush1.msra.mxu0 0.0
    %298 = vmatprep.subr.mxu0 0.0
    %299 = vmatpush1.msra.mxu0 0.0
    %300 = vmatprep.subr.mxu0 0.0
    %301 = vmatpush1.msra.mxu0 0.0
    %302 = vmatprep.subr.mxu0 0.0
    %303 = vmatpush1.msra.mxu0 0.0
    %304 = vmatprep.subr.mxu0 0.0
    %305 = vmatpush1.msra.mxu0 0.0
    %306 = vmatprep.subr.mxu0 0.0
    %307 = vmatpush1.msra.mxu0 0.0
    %308 = vmatprep.subr.mxu0 0.0
    %309 = vmatpush1.msra.mxu0 0.0
    %310 = vmatprep.subr.mxu0 0.0
    %311 = vmatpush1.msra.mxu0 0.0
    %312 = vmatprep.subr.mxu0 0.0
    %v313 = vand.u32 %v54, 4294901760
    %314 = vmatpush1.msra.mxu0 %v313
    %315 = vmatprep.subr.mxu0 0.0
    %316 = vmatpush2.msra.mxu0 0.0
    %317 = vmatprep.subr.mxu0 0.0
    %318 = vmatpush2.msra.mxu0 0.0
    %319 = vmatprep.subr.mxu0 0.0
    %320 = vmatpush2.msra.mxu0 0.0
    %321 = vmatprep.subr.mxu0 0.0
    %322 = vmatpush2.msra.mxu0 0.0
    %323 = vmatprep.subr.mxu0 0.0
    %324 = vmatpush2.msra.mxu0 0.0
    %325 = vmatprep.subr.mxu0 0.0
    %326 = vmatpush2.msra.mxu0 0.0
    %327 = vmatprep.subr.mxu0 0.0
    %328 = vmatpush2.msra.mxu0 0.0
    %329 = vmatprep.subr.mxu0 0.0
    %330 = vmatpush2.msra.mxu0 0.0
    %331 = vmatprep.subr.mxu0 0.0
    %332 = vmatpush2.msra.mxu0 0.0
    %333 = vmatprep.subr.mxu0 0.0
    %334 = vmatpush2.msra.mxu0 0.0
    %335 = vmatprep.subr.mxu0 0.0
    %336 = vmatpush2.msra.mxu0 0.0
    %337 = vmatprep.subr.mxu0 0.0
    %338 = vmatpush2.msra.mxu0 0.0
    %339 = vmatprep.subr.mxu0 0.0
    %340 = vmatpush2.msra.mxu0 0.0
    %341 = vmatprep.subr.mxu0 0.0
    %342 = vmatpush2.msra.mxu0 0.0
    %343 = vmatprep.subr.mxu0 0.0
    %344 = vmatpush2.msra.mxu0 0.0
    %345 = vmatprep.subr.mxu0 0.0
    %346 = vmatpush2.msra.mxu0 0.0
    %347 = vmatprep.mubr.f32.mxu0 0.0
    %v348 = vand.u32 %v50, 4294901760
    %v349 = vsub.f32 %v50, %v348
    %v350 = vand.u32 %v349, 4294901760
    %351 = vmatmul.mubr.f32.gmra.mxu0 %v350
    %v352 = vpop.f32.mrf.mxu0
    %v353 = vadd.f32 %v279, %v352
    %v354 = vpop.f32.mrf.mxu0
    %355 = vdwg.mxu0
    %356 = vmatprep.subr.mxu0 0.0
    %357 = vmatpush1.msra.mxu0 0.0
    %358 = vmatprep.subr.mxu0 0.0
    %359 = vmatpush1.msra.mxu0 0.0
    %360 = vmatprep.subr.mxu0 0.0
    %361 = vmatpush1.msra.mxu0 0.0
    %362 = vmatprep.subr.mxu0 0.0
    %363 = vmatpush1.msra.mxu0 0.0
    %364 = vmatprep.subr.mxu0 0.0
    %365 = vmatpush1.msra.mxu0 0.0
    %366 = vmatprep.subr.mxu0 0.0
    %367 = vmatpush1.msra.mxu0 0.0
    %368 = vmatprep.subr.mxu0 0.0
    %369 = vmatpush1.msra.mxu0 0.0
    %370 = vmatprep.subr.mxu0 0.0
    %371 = vmatpush1.msra.mxu0 0.0
    %372 = vmatprep.subr.mxu0 0.0
    %373 = vmatpush1.msra.mxu0 0.0
    %374 = vmatprep.subr.mxu0 0.0
    %375 = vmatpush1.msra.mxu0 0.0
    %376 = vmatprep.subr.mxu0 0.0
    %377 = vmatpush1.msra.mxu0 0.0
    %378 = vmatprep.subr.mxu0 0.0
    %379 = vmatpush1.msra.mxu0 0.0
    %380 = vmatprep.subr.mxu0 0.0
    %381 = vmatpush1.msra.mxu0 0.0
    %382 = vmatprep.subr.mxu0 0.0
    %383 = vmatpush1.msra.mxu0 0.0
    %384 = vmatprep.subr.mxu0 0.0
    %385 = vmatpush1.msra.mxu0 0.0
    %386 = vmatprep.subr.mxu0 0.0
    %v387 = vand.u32 %v54, 4294901760
    %v388 = vsub.f32 %v54, %v387
    %v389 = vand.u32 %v388, 4294901760
    %390 = vmatpush1.msra.mxu0 %v389
    %391 = vmatprep.subr.mxu0 0.0
    %392 = vmatpush2.msra.mxu0 0.0
    %393 = vmatprep.subr.mxu0 0.0
    %394 = vmatpush2.msra.mxu0 0.0
    %395 = vmatprep.subr.mxu0 0.0
    %396 = vmatpush2.msra.mxu0 0.0
    %397 = vmatprep.subr.mxu0 0.0
    %398 = vmatpush2.msra.mxu0 0.0
    %399 = vmatprep.subr.mxu0 0.0
    %400 = vmatpush2.msra.mxu0 0.0
    %401 = vmatprep.subr.mxu0 0.0
    %402 = vmatpush2.msra.mxu0 0.0
    %403 = vmatprep.subr.mxu0 0.0
    %404 = vmatpush2.msra.mxu0 0.0
    %405 = vmatprep.subr.mxu0 0.0
    %406 = vmatpush2.msra.mxu0 0.0
    %407 = vmatprep.subr.mxu0 0.0
    %408 = vmatpush2.msra.mxu0 0.0
    %409 = vmatprep.subr.mxu0 0.0
    %410 = vmatpush2.msra.mxu0 0.0
    %411 = vmatprep.subr.mxu0 0.0
    %412 = vmatpush2.msra.mxu0 0.0
    %413 = vmatprep.subr.mxu0 0.0
    %414 = vmatpush2.msra.mxu0 0.0
    %415 = vmatprep.subr.mxu0 0.0
    %416 = vmatpush2.msra.mxu0 0.0
    %417 = vmatprep.subr.mxu0 0.0
    %418 = vmatpush2.msra.mxu0 0.0
    %419 = vmatprep.subr.mxu0 0.0
    %420 = vmatpush2.msra.mxu0 0.0
    %421 = vmatprep.subr.mxu0 0.0
    %422 = vmatpush2.msra.mxu0 0.0
    %423 = vmatprep.mubr.f32.mxu0 0.0
    %v424 = vand.u32 %v50, 4294901760
    %425 = vmatmul.mubr.f32.gmra.mxu0 %v424
    %v426 = vpop.f32.mrf.mxu0
    %v427 = vadd.f32 %v353, %v426
    %v428 = vpop.f32.mrf.mxu0
    %429 = vdwg.mxu0
    %430 = vmatprep.subr.mxu0 0.0
    %431 = vmatpush1.msra.mxu0 0.0
    %432 = vmatprep.subr.mxu0 0.0
    %433 = vmatpush1.msra.mxu0 0.0
    %434 = vmatprep.subr.mxu0 0.0
    %435 = vmatpush1.msra.mxu0 0.0
    %436 = vmatprep.subr.mxu0 0.0
    %437 = vmatpush1.msra.mxu0 0.0
    %438 = vmatprep.subr.mxu0 0.0
    %439 = vmatpush1.msra.mxu0 0.0
    %440 = vmatprep.subr.mxu0 0.0
    %441 = vmatpush1.msra.mxu0 0.0
    %442 = vmatprep.subr.mxu0 0.0
    %443 = vmatpush1.msra.mxu0 0.0
    %444 = vmatprep.subr.mxu0 0.0
    %445 = vmatpush1.msra.mxu0 0.0
    %446 = vmatprep.subr.mxu0 0.0
    %447 = vmatpush1.msra.mxu0 0.0
    %448 = vmatprep.subr.mxu0 0.0
    %449 = vmatpush1.msra.mxu0 0.0
    %450 = vmatprep.subr.mxu0 0.0
    %451 = vmatpush1.msra.mxu0 0.0
    %452 = vmatprep.subr.mxu0 0.0
    %453 = vmatpush1.msra.mxu0 0.0
    %454 = vmatprep.subr.mxu0 0.0
    %455 = vmatpush1.msra.mxu0 0.0
    %456 = vmatprep.subr.mxu0 0.0
    %457 = vmatpush1.msra.mxu0 0.0
    %458 = vmatprep.subr.mxu0 0.0
    %459 = vmatpush1.msra.mxu0 0.0
    %460 = vmatprep.subr.mxu0 0.0
    %v461 = vand.u32 %v54, 4294901760
    %462 = vmatpush1.msra.mxu0 %v461
    %463 = vmatprep.subr.mxu0 0.0
    %464 = vmatpush2.msra.mxu0 0.0
    %465 = vmatprep.subr.mxu0 0.0
    %466 = vmatpush2.msra.mxu0 0.0
    %467 = vmatprep.subr.mxu0 0.0
    %468 = vmatpush2.msra.mxu0 0.0
    %469 = vmatprep.subr.mxu0 0.0
    %470 = vmatpush2.msra.mxu0 0.0
    %471 = vmatprep.subr.mxu0 0.0
    %472 = vmatpush2.msra.mxu0 0.0
    %473 = vmatprep.subr.mxu0 0.0
    %474 = vmatpush2.msra.mxu0 0.0
    %475 = vmatprep.subr.mxu0 0.0
    %476 = vmatpush2.msra.mxu0 0.0
    %477 = vmatprep.subr.mxu0 0.0
    %478 = vmatpush2.msra.mxu0 0.0
    %479 = vmatprep.subr.mxu0 0.0
    %480 = vmatpush2.msra.mxu0 0.0
    %481 = vmatprep.subr.mxu0 0.0
    %482 = vmatpush2.msra.mxu0 0.0
    %483 = vmatprep.subr.mxu0 0.0
    %484 = vmatpush2.msra.mxu0 0.0
    %485 = vmatprep.subr.mxu0 0.0
    %486 = vmatpush2.msra.mxu0 0.0
    %487 = vmatprep.subr.mxu0 0.0
    %488 = vmatpush2.msra.mxu0 0.0
    %489 = vmatprep.subr.mxu0 0.0
    %490 = vmatpush2.msra.mxu0 0.0
    %491 = vmatprep.subr.mxu0 0.0
    %492 = vmatpush2.msra.mxu0 0.0
    %493 = vmatprep.subr.mxu0 0.0
    %494 = vmatpush2.msra.mxu0 0.0
    %495 = vmatprep.mubr.f32.mxu0 0.0
    %v496 = vand.u32 %v50, 4294901760
    %497 = vmatmul.mubr.f32.gmra.mxu0 %v496
    %v498 = vpop.f32.mrf.mxu0
    %v499 = vadd.f32 %v427, %v498
    %v500 = vpop.f32.mrf.mxu0
    %501 = vdwg.mxu0
    %vm502 = vcmask 33792
    %503 = vst.msk [vmem:[#allocation7] sm:$0x3] %vm502, %v499
    // Predicated region
    $region22: #{tpu_custom_call.1} parent=1 // pred_check
      _
    $region23: #{tpu_custom_call.1} parent=1 // pred_check_branch
      %505 = sbr.rel (0) target = $region25
    $region24: #{tpu_custom_call.1} parent=1 // pred_region
      %s507 = ssub.s32 32, 32
      %508 = vsyncadd [#allocation4], %s507
      %s510 = sshll.u32 [#allocation7], 4
      %s511 = int_to_ptr.vmem [resolvable:$true] %s510
      %513 = dma.vmem_to_hbm [thread:$0]  %s511, 32, %s3, [#allocation4]
    $region25: #{tpu_custom_call.1} parent=1 // pred_fallthru
      _
    // Predicated region
    $region26: #{tpu_custom_call.1} parent=1 // pred_check
      _
    $region27: #{tpu_custom_call.1} parent=1 // pred_check_branch
      %515 = sbr.rel (0) target = $region29
    $region28: #{tpu_custom_call.1} parent=1 // pred_region
      %516 = dma.done [#allocation4], 32
    $region29: #{tpu_custom_call.1} parent=1 // pred_fallthru
      _
    %517 = vsyncpa [#allocation3], 1
    %518 = vsyncpa [#allocation6], 1
    %519 = vsyncpa [#allocation4], 1

</llo_original>
